<compile_context>
chip_gen: v6e
topology: v6e:2x2x1
jax: 0.10.0
libtpu: 0.0.40
codegen_flags: <defaults>
</compile_context>

<pallas_src>
import functools

import jax
import jax.numpy as jnp
import numpy as np
from jax.experimental import pallas as pl
from jax.experimental.pallas import tpu as pltpu


# bf16 operands + f32 accumulation is the MXU fast path on v5e / v6e / v7x.
MXU_DTYPE = jnp.bfloat16
# Safe on every generation at these shapes; raise to ~64-96 MiB on v6e for big tiles.
VMEM_LIMIT = 32 * 1024 * 1024


def _mm(a, b):
    """Matmul on the MXU: bf16 operands, f32 accumulation (VPU math stays f32)."""
    return jnp.dot(a.astype(MXU_DTYPE), b.astype(MXU_DTYPE),
                   preferred_element_type=jnp.float32)


# ----------------------------------------------------------------------------
# Q/K/V projection kernel (hoisted out of the attention kernel; bf16 outputs,
# 1/sqrt(head_dim) folded into Q)
# ----------------------------------------------------------------------------
def _proj_kernel(h_ref, qw_ref, kw_ref, vw_ref, q_ref, k_ref, v_ref, *, inv_scale):
    hin = h_ref[...]
    q_ref[...] = (_mm(hin, qw_ref[...]) * inv_scale).astype(q_ref.dtype)
    k_ref[...] = _mm(hin, kw_ref[...]).astype(k_ref.dtype)
    v_ref[...] = _mm(hin, vw_ref[...]).astype(v_ref.dtype)


def _project_qkv(h, prm, num_heads, row_tile):
    n, fin = h.shape
    f = prm["Qw"].shape[1]
    d = f // num_heads
    assert n % row_tile == 0 and row_tile % 8 == 0
    kernel = functools.partial(_proj_kernel, inv_scale=float(1.0 / np.sqrt(d)))
    return pl.pallas_call(
        kernel,
        out_shape=tuple(jax.ShapeDtypeStruct((n, f), MXU_DTYPE) for _ in range(3)),
        grid=(n // row_tile,),
        in_specs=[
            pl.BlockSpec((row_tile, fin), lambda i: (i, 0)),   # h tile
            pl.BlockSpec((fin, f), lambda i: (0, 0)),          # Qw (resident)
            pl.BlockSpec((fin, f), lambda i: (0, 0)),          # Kw
            pl.BlockSpec((fin, f), lambda i: (0, 0)),          # Vw
        ],
        out_specs=tuple(pl.BlockSpec((row_tile, f), lambda i: (i, 0))
                        for _ in range(3)),
        compiler_params=pltpu.CompilerParams(
            dimension_semantics=("parallel",), vmem_limit_bytes=VMEM_LIMIT),
    )(h, prm["Qw"], prm["Kw"], prm["Vw"])


# ----------------------------------------------------------------------------
# Fused multi-head attention kernel (edge-tile grid, bf16 selection matmuls)
# ----------------------------------------------------------------------------
def _attn_kernel(e_ref, src_ref, dstc_ref, dstr_ref, q_ref, k_ref, v_ref,
                 ew_ref, mfh_ref, mhf_ref, hattn_ref, eout_ref, z_s):
    step = pl.program_id(0)
    te = e_ref.shape[0]
    n, _ = q_ref.shape

    @pl.when(step == 0)
    def _init():
        hattn_ref[...] = jnp.zeros_like(hattn_ref)   # wV accumulator (resident out)
        z_s[...] = jnp.zeros_like(z_s)               # per-head z accumulator (N,H)

    # edge-feature projection for this tile (bias-free -> no zero-bias add)
    proj_e = _mm(e_ref[...], ew_ref[...])                                # (TE, F)

    # one-hot selectors in-register from int32 ids; 0/1 is exact in bf16
    col = jax.lax.broadcasted_iota(jnp.int32, (te, n), 1)
    src_oh = (src_ref[...] == col).astype(MXU_DTYPE)                     # (TE, N)
    dst_oh = (dstc_ref[...] == col).astype(MXU_DTYPE)                    # (TE, N)
    row = jax.lax.broadcasted_iota(jnp.int32, (n, te), 0)
    dst_oh_t = (row == dstr_ref[...]).astype(MXU_DTYPE)                  # (N, TE)

    # gathers: bf16 selector x bf16 node state -> f32 accumulation on the MXU
    k_src = jnp.dot(src_oh, k_ref[...], preferred_element_type=jnp.float32)
    q_dst = jnp.dot(dst_oh, q_ref[...], preferred_element_type=jnp.float32)
    v_src = jnp.dot(src_oh, v_ref[...], preferred_element_type=jnp.float32)

    # score = K_h[src] * Q_h[dst]/sqrt(d) * proj_e   (inv_scale already in Q)
    score = k_src * q_dst * proj_e                                       # (TE, F)
    eout_ref[...] = score

    # per-head sum / exp / broadcast via static block-diagonal mask matmuls
    head_sum = jnp.dot(score, mfh_ref[...],
                       preferred_element_type=jnp.float32)               # (TE, H)
    exps = jnp.exp(jnp.clip(head_sum, -5.0, 5.0))                        # (TE, H)
    s_b = jnp.dot(exps, mhf_ref[...],
                  preferred_element_type=jnp.float32)                    # (TE, F)

    # scatter-add (segment sum) to destination nodes, bf16 MXU, f32 accumulation
    weighted_v = (v_src * s_b).astype(MXU_DTYPE)
    hattn_ref[...] += jnp.dot(dst_oh_t, weighted_v,
                              preferred_element_type=jnp.float32)
    z_s[...] += jnp.dot(dst_oh_t, exps.astype(MXU_DTYPE),
                        preferred_element_type=jnp.float32)

    @pl.when(step == pl.num_programs(0) - 1)
    def _finalize():
        zb = jnp.dot(z_s[...], mhf_ref[...],
                     preferred_element_type=jnp.float32)                 # (N, F)
        hattn_ref[...] = hattn_ref[...] * pl.reciprocal(zb + 1e-6, approx=True)


def _attention(q, k, v, e, src, dst, ew, num_heads, edge_tile):
    n, f = q.shape
    e_num, fin = e.shape
    d = f // num_heads
    assert e_num % edge_tile == 0 and edge_tile % 128 == 0

    src_col = src.reshape(e_num, 1).astype(jnp.int32)
    dst_col = dst.reshape(e_num, 1).astype(jnp.int32)
    dst_row = dst.reshape(1, e_num).astype(jnp.int32)

    head_of_col = np.arange(f) // d
    mask_fh = jnp.asarray((head_of_col[:, None] ==
                           np.arange(num_heads)[None, :]).astype(np.float32))
    mask_hf = jnp.asarray((np.arange(num_heads)[:, None] ==
                           head_of_col[None, :]).astype(np.float32))

    return pl.pallas_call(
        _attn_kernel,
        out_shape=(jax.ShapeDtypeStruct((n, f), jnp.float32),      # h_attn
                   jax.ShapeDtypeStruct((e_num, f), jnp.float32)), # e_out
        grid=(e_num // edge_tile,),
        in_specs=[
            pl.BlockSpec((edge_tile, fin), lambda i: (i, 0)),      # e tile
            pl.BlockSpec((edge_tile, 1), lambda i: (i, 0)),        # src ids (col)
            pl.BlockSpec((edge_tile, 1), lambda i: (i, 0)),        # dst ids (col)
            pl.BlockSpec((1, edge_tile), lambda i: (0, i)),        # dst ids (row)
            pl.BlockSpec((n, f), lambda i: (0, 0)),                # Q_h bf16 (resident)
            pl.BlockSpec((n, f), lambda i: (0, 0)),                # K_h bf16
            pl.BlockSpec((n, f), lambda i: (0, 0)),                # V_h bf16
            pl.BlockSpec((fin, f), lambda i: (0, 0)),              # Ew
            pl.BlockSpec((f, num_heads), lambda i: (0, 0)),        # block-diag (F,H)
            pl.BlockSpec((num_heads, f), lambda i: (0, 0)),        # block-diag (H,F)
        ],
        out_specs=(
            pl.BlockSpec((n, f), lambda i: (0, 0)),                # h_attn (resident)
            pl.BlockSpec((edge_tile, f), lambda i: (i, 0)),        # e_out tile
        ),
        scratch_shapes=[pltpu.VMEM((n, num_heads), jnp.float32)],  # z accumulator
        compiler_params=pltpu.CompilerParams(
            dimension_semantics=("arbitrary",), vmem_limit_bytes=VMEM_LIMIT),
    )(e, src_col, dst_col, dst_row, q, k, v, ew, mask_fh, mask_hf)


# ----------------------------------------------------------------------------
# Fused O-projection + residual + BN + FFN + residual + BN kernel
# grid = (phase, row_tile); t1/t2 cached in VMEM so nothing is recomputed.
#   phase 0: t1 = res + O(x), cache t1, accumulate BN1 stats
#   phase 1: h1 = BN1(t1); t2 = h1 + FFN(h1), cache t2, accumulate BN2 stats
#   phase 2: out = BN2(t2)
# ----------------------------------------------------------------------------
def _post_kernel(x_ref, res_ref, ow_ref, ob_ref, g1_ref, b1_ref,
                 w1_ref, c1_ref, w2_ref, c2_ref, g2_ref, b2_ref,
                 o_ref, t1_s, t2_s, s1, q1, s2, q2, *, eps, inv_rows):
    phase = pl.program_id(0)
    i = pl.program_id(1)

    @pl.when((phase == 0) & (i == 0))
    def _init():
        zero = jnp.zeros(s1.shape, jnp.float32)
        s1[...] = zero
        q1[...] = zero
        s2[...] = zero
        q2[...] = zero

    @pl.when(phase == 0)
    def _phase0():
        # O projection + residual (dropout p=0.0 -> identity)
        t1 = res_ref[...] + _mm(x_ref[...], ow_ref[...]) + ob_ref[...]
        t1_s[i] = t1
        s1[...] += jnp.sum(t1, axis=0, keepdims=True)
        q1[...] += jnp.sum(t1 * t1, axis=0, keepdims=True)

    @pl.when(phase == 1)
    def _phase1():
        t1 = t1_s[i]
        mean1 = s1[...] * inv_rows
        var1 = q1[...] * inv_rows - mean1 * mean1        # biased (training-mode BN)
        h1 = (t1 - mean1) * jax.lax.rsqrt(var1 + eps) * g1_ref[...] + b1_ref[...]
        hid = jnp.maximum(_mm(h1, w1_ref[...]) + c1_ref[...], 0.0)
        t2 = h1 + _mm(hid, w2_ref[...]) + c2_ref[...]
        t2_s[i] = t2
        s2[...] += jnp.sum(t2, axis=0, keepdims=True)
        q2[...] += jnp.sum(t2 * t2, axis=0, keepdims=True)

    @pl.when(phase == 2)
    def _phase2():
        t2 = t2_s[i]
        mean2 = s2[...] * inv_rows
        var2 = q2[...] * inv_rows - mean2 * mean2
        o_ref[...] = ((t2 - mean2) * jax.lax.rsqrt(var2 + eps)
                      * g2_ref[...] + b2_ref[...])


def _post_attention(x, res, prm, tag, row_tile):
    m, f = x.shape
    hid = prm[f"FFN{tag}_w1"].shape[1]
    assert m % row_tile == 0 and row_tile % 8 == 0
    n_tiles = m // row_tile

    kernel = functools.partial(_post_kernel, eps=1e-5, inv_rows=float(1.0 / m))
    full = lambda ph, i: (0, 0)
    # x / res are only consumed in phase 0; freeze their blocks afterwards (no re-DMA)
    in_map = lambda ph, i: (i * (1 - jnp.minimum(ph, 1)), 0)
    # output blocks only advance in phase 2 -> each HBM block written exactly once
    out_map = lambda ph, i: (i * (ph // 2), 0)

    return pl.pallas_call(
        kernel,
        out_shape=jax.ShapeDtypeStruct((m, f), jnp.float32),
        grid=(3, n_tiles),
        in_specs=[
            pl.BlockSpec((row_tile, f), in_map),    # x (attention output)
            pl.BlockSpec((row_tile, f), in_map),    # residual input
            pl.BlockSpec((f, f), full),             # O weight
            pl.BlockSpec((1, f), full),             # O bias
            pl.BlockSpec((1, f), full),             # bn1 gamma
            pl.BlockSpec((1, f), full),             # bn1 beta
            pl.BlockSpec((f, hid), full),           # FFN w1
            pl.BlockSpec((1, hid), full),           # FFN b1
            pl.BlockSpec((hid, f), full),           # FFN w2
            pl.BlockSpec((1, f), full),             # FFN b2
            pl.BlockSpec((1, f), full),             # bn2 gamma
            pl.BlockSpec((1, f), full),             # bn2 beta
        ],
        out_specs=pl.BlockSpec((row_tile, f), out_map),
        scratch_shapes=[
            pltpu.VMEM((n_tiles, row_tile, f), jnp.float32),   # t1 cache
            pltpu.VMEM((n_tiles, row_tile, f), jnp.float32),   # t2 cache
            pltpu.VMEM((1, f), jnp.float32),                   # BN1 sum
            pltpu.VMEM((1, f), jnp.float32),                   # BN1 sum of squares
            pltpu.VMEM((1, f), jnp.float32),                   # BN2 sum
            pltpu.VMEM((1, f), jnp.float32),                   # BN2 sum of squares
        ],
        compiler_params=pltpu.CompilerParams(
            dimension_semantics=("arbitrary", "arbitrary"),
            vmem_limit_bytes=VMEM_LIMIT),
    )(x, res,
      prm[f"O{tag}w"], prm[f"O{tag}b"],
      prm[f"bn1_{tag}_g"], prm[f"bn1_{tag}_b"],
      prm[f"FFN{tag}_w1"], prm[f"FFN{tag}_b1"],
      prm[f"FFN{tag}_w2"], prm[f"FFN{tag}_b2"],
      prm[f"bn2_{tag}_g"], prm[f"bn2_{tag}_b"])


# ----------------------------------------------------------------------------
# GraphTransformerLayer forward (4 pallas_calls: proj, attention, post_h, post_e)
# ----------------------------------------------------------------------------
def graph_transformer_layer(h, e, src, dst, params, num_heads,
                            edge_tile=256, node_row_tile=None, edge_row_tile=256):
    n = h.shape[0]
    if node_row_tile is None:
        node_row_tile = n
    q, k, v = _project_qkv(h, params, num_heads, node_row_tile)
    h_attn, e_attn = _attention(q, k, v, e, src, dst, params["Ew"],
                                num_heads, edge_tile)
    h_out = _post_attention(h_attn, h, params, "h", node_row_tile)
    e_out = _post_attention(e_attn, e, params, "e", edge_row_tile)
    return h_out, e_out


# ----------------------------------------------------------------------------
# Pure-JAX reference (mirrors the kernel's MXU / bf16-storage precision policy
# for a tight tolerance check; semantics match the PyTorch module defaults)
# ----------------------------------------------------------------------------
def _bn_ref(x, g, b, eps=1e-5):
    mean = x.mean(0, keepdims=True)
    var = ((x - mean) ** 2).mean(0, keepdims=True)
    return (x - mean) / jnp.sqrt(var + eps) * g + b


def reference(h, e, src, dst, prm, num_heads):
    n = h.shape[0]
    f = prm["Qw"].shape[1]
    en = e.shape[0]
    d = f // num_heads
    inv_scale = 1.0 / np.sqrt(d)

    def r(x):  # bf16 storage/operand rounding used on the kernel's MXU path
        return x.astype(MXU_DTYPE).astype(jnp.float32)

    qh = r(_mm(h, prm["Qw"]) * inv_scale)
    kh = r(_mm(h, prm["Kw"]))
    vh = r(_mm(h, prm["Vw"]))
    pe = _mm(e, prm["Ew"])

    score = kh[src] * qh[dst] * pe                                 # (E, F)
    e_attn = score
    head_sum = score.reshape(en, num_heads, d).sum(-1)             # (E, H)
    s = jnp.exp(jnp.clip(head_sum, -5.0, 5.0))                     # (E, H)
    wv_e = (vh[src].reshape(en, num_heads, d) * s[:, :, None]).reshape(en, f)
    wv = jax.ops.segment_sum(r(wv_e), dst, num_segments=n)
    z = jax.ops.segment_sum(r(s), dst, num_segments=n)             # (N, H)
    zb = jnp.repeat(z, d, axis=1)                                  # (N, F)
    h_attn = wv / (zb + 1e-6)

    def post(x, res, tag):
        t1 = res + _mm(x, prm[f"O{tag}w"]) + prm[f"O{tag}b"]
        h1 = _bn_ref(t1, prm[f"bn1_{tag}_g"], prm[f"bn1_{tag}_b"])
        hid = jnp.maximum(_mm(h1, prm[f"FFN{tag}_w1"]) + prm[f"FFN{tag}_b1"], 0.0)
        t2 = h1 + _mm(hid, prm[f"FFN{tag}_w2"]) + prm[f"FFN{tag}_b2"]
        return _bn_ref(t2, prm[f"bn2_{tag}_g"], prm[f"bn2_{tag}_b"])

    return post(h_attn, h, "h"), post(e_attn, e, "e")


# ----------------------------------------------------------------------------
if __name__ == "__main__":
    N, E = 64, 256
    IN_DIM = OUT_DIM = 128          # lane-dense feature dim (multiple of 128)
    HEADS = 4
    HID = 2 * OUT_DIM

    key = jax.random.PRNGKey(0)
    ks = jax.random.split(key, 26)

    def w(k, shape, scale=0.1):
        return (scale * jax.random.normal(k, shape)).astype(jnp.float32)

    params = {
        "Qw": w(ks[0], (IN_DIM, OUT_DIM)),
        "Kw": w(ks[1], (IN_DIM, OUT_DIM)),
        "Vw": w(ks[2], (IN_DIM, OUT_DIM)),
        "Ew": w(ks[3], (IN_DIM, OUT_DIM)),
        "Ohw": w(ks[4], (OUT_DIM, OUT_DIM)), "Ohb": w(ks[5], (1, OUT_DIM)),
        "Oew": w(ks[6], (OUT_DIM, OUT_DIM)), "Oeb": w(ks[7], (1, OUT_DIM)),
        "bn1_h_g": 1.0 + w(ks[8], (1, OUT_DIM)), "bn1_h_b": w(ks[9], (1, OUT_DIM)),
        "bn1_e_g": 1.0 + w(ks[10], (1, OUT_DIM)), "bn1_e_b": w(ks[11], (1, OUT_DIM)),
        "FFNh_w1": w(ks[12], (OUT_DIM, HID)), "FFNh_b1": w(ks[13], (1, HID)),
        "FFNh_w2": w(ks[14], (HID, OUT_DIM)), "FFNh_b2": w(ks[15], (1, OUT_DIM)),
        "FFNe_w1": w(ks[16], (OUT_DIM, HID)), "FFNe_b1": w(ks[17], (1, HID)),
        "FFNe_w2": w(ks[18], (HID, OUT_DIM)), "FFNe_b2": w(ks[19], (1, OUT_DIM)),
        "bn2_h_g": 1.0 + w(ks[20], (1, OUT_DIM)), "bn2_h_b": w(ks[21], (1, OUT_DIM)),
        "bn2_e_g": 1.0 + w(ks[22], (1, OUT_DIM)), "bn2_e_b": w(ks[23], (1, OUT_DIM)),
    }

    h = w(ks[24], (N, IN_DIM), scale=1.0)
    e = w(ks[25], (E, IN_DIM), scale=1.0)
    src = jnp.asarray(np.arange(E) % N, dtype=jnp.int32)
    dst = jnp.asarray((np.arange(E) * 3 + 1) % N, dtype=jnp.int32)

    h_out, e_out = graph_transformer_layer(
        h, e, src, dst, params, HEADS,
        edge_tile=256, node_row_tile=64, edge_row_tile=256)
    jax.block_until_ready((h_out, e_out))

    h_ref, e_ref = reference(h, e, src, dst, params, HEADS)
    np.testing.assert_allclose(np.asarray(h_out), np.asarray(h_ref),
                               rtol=2e-2, atol=2e-2)
    np.testing.assert_allclose(np.asarray(e_out), np.asarray(e_ref),
                               rtol=2e-2, atol=2e-2)

    print("KERNEL_OK")
</pallas_src>

<mosaic_0001>
module attributes {stable_mosaic.version = 11 : i64} {
  func.func @_proj_kernel(%arg0: i32, %arg1: memref<64x128xf32, #tpu.memory_space<vmem>>, %arg2: memref<128x128xf32, #tpu.memory_space<vmem>>, %arg3: memref<128x128xf32, #tpu.memory_space<vmem>>, %arg4: memref<128x128xf32, #tpu.memory_space<vmem>>, %arg5: memref<64x128xbf16, #tpu.memory_space<vmem>>, %arg6: memref<64x128xbf16, #tpu.memory_space<vmem>>, %arg7: memref<64x128xbf16, #tpu.memory_space<vmem>>) attributes {dimension_semantics = [#tpu.dimension_semantics<parallel>], iteration_bounds = array<i64: 1>, scalar_prefetch = 0 : i64, scratch_operands = 0 : i64, tpu.core_type = #tpu.core_type<tc>, window_params = [{transform_indices = @transform_0, window_bounds = array<i64: 64, 128>}, {pipeline_mode = #tpu.pipeline_mode<synchronous>, transform_indices = @transform_1, window_bounds = array<i64: 128, 128>}, {pipeline_mode = #tpu.pipeline_mode<synchronous>, transform_indices = @transform_2, window_bounds = array<i64: 128, 128>}, {pipeline_mode = #tpu.pipeline_mode<synchronous>, transform_indices = @transform_3, window_bounds = array<i64: 128, 128>}, {transform_indices = @transform_4, window_bounds = array<i64: 64, 128>}, {transform_indices = @transform_5, window_bounds = array<i64: 64, 128>}, {transform_indices = @transform_6, window_bounds = array<i64: 64, 128>}]} {
    %c0 = arith.constant 0 : index
    %c0_0 = arith.constant 0 : index
    %0 = vector.load %arg1[%c0, %c0_0] : memref<64x128xf32, #tpu.memory_space<vmem>>, vector<64x128xf32>
    %c0_1 = arith.constant 0 : index
    %c0_2 = arith.constant 0 : index
    %1 = vector.load %arg2[%c0_1, %c0_2] : memref<128x128xf32, #tpu.memory_space<vmem>>, vector<128x128xf32>
    %2 = arith.truncf %0 : vector<64x128xf32> to vector<64x128xbf16>
    %3 = arith.truncf %1 : vector<128x128xf32> to vector<128x128xbf16>
    %cst = arith.constant dense<0.000000e+00> : vector<64x128xf32>
    %4 = tpu.matmul %2, %3, %cst {dimension_numbers = #tpu.dot_dimension_numbers<[1], [0], [0], [1], [0, 0, 1, 1], [], []>} : vector<64x128xbf16>, vector<128x128xbf16>, vector<64x128xf32> -> vector<64x128xf32>
    %cst_3 = arith.constant 0.176776692 : f32
    %5 = vector.broadcast %cst_3 : f32 to vector<64x128xf32>
    %6 = arith.mulf %4, %5 : vector<64x128xf32>
    %7 = arith.truncf %6 : vector<64x128xf32> to vector<64x128xbf16>
    %c0_4 = arith.constant 0 : index
    %c0_5 = arith.constant 0 : index
    %8 = vector.load %arg5[%c0_4, %c0_5] : memref<64x128xbf16, #tpu.memory_space<vmem>>, vector<64x128xbf16>
    tpu.vector_store %arg5[%c0_4, %c0_5], %7 {strides = array<i32>} : memref<64x128xbf16, #tpu.memory_space<vmem>>, vector<64x128xbf16>,
    %c0_6 = arith.constant 0 : index
    %c0_7 = arith.constant 0 : index
    %9 = vector.load %arg3[%c0_6, %c0_7] : memref<128x128xf32, #tpu.memory_space<vmem>>, vector<128x128xf32>
    %10 = arith.truncf %0 : vector<64x128xf32> to vector<64x128xbf16>
    %11 = arith.truncf %9 : vector<128x128xf32> to vector<128x128xbf16>
    %cst_8 = arith.constant dense<0.000000e+00> : vector<64x128xf32>
    %12 = tpu.matmul %10, %11, %cst_8 {dimension_numbers = #tpu.dot_dimension_numbers<[1], [0], [0], [1], [0, 0, 1, 1], [], []>} : vector<64x128xbf16>, vector<128x128xbf16>, vector<64x128xf32> -> vector<64x128xf32>
    %13 = arith.truncf %12 : vector<64x128xf32> to vector<64x128xbf16>
    %c0_9 = arith.constant 0 : index
    %c0_10 = arith.constant 0 : index
    %14 = vector.load %arg6[%c0_9, %c0_10] : memref<64x128xbf16, #tpu.memory_space<vmem>>, vector<64x128xbf16>
    tpu.vector_store %arg6[%c0_9, %c0_10], %13 {strides = array<i32>} : memref<64x128xbf16, #tpu.memory_space<vmem>>, vector<64x128xbf16>,
    %c0_11 = arith.constant 0 : index
    %c0_12 = arith.constant 0 : index
    %15 = vector.load %arg4[%c0_11, %c0_12] : memref<128x128xf32, #tpu.memory_space<vmem>>, vector<128x128xf32>
    %16 = arith.truncf %0 : vector<64x128xf32> to vector<64x128xbf16>
    %17 = arith.truncf %15 : vector<128x128xf32> to vector<128x128xbf16>
    %cst_13 = arith.constant dense<0.000000e+00> : vector<64x128xf32>
    %18 = tpu.matmul %16, %17, %cst_13 {dimension_numbers = #tpu.dot_dimension_numbers<[1], [0], [0], [1], [0, 0, 1, 1], [], []>} : vector<64x128xbf16>, vector<128x128xbf16>, vector<64x128xf32> -> vector<64x128xf32>
    %19 = arith.truncf %18 : vector<64x128xf32> to vector<64x128xbf16>
    %c0_14 = arith.constant 0 : index
    %c0_15 = arith.constant 0 : index
    %20 = vector.load %arg7[%c0_14, %c0_15] : memref<64x128xbf16, #tpu.memory_space<vmem>>, vector<64x128xbf16>
    tpu.vector_store %arg7[%c0_14, %c0_15], %19 {strides = array<i32>} : memref<64x128xbf16, #tpu.memory_space<vmem>>, vector<64x128xbf16>,
    return
  }
  func.func @transform_0(%arg0: i32) -> (i32, i32) {
    %c0_i32 = arith.constant 0 : i32
    %c0_i32_0 = arith.constant 0 : i32
    return %arg0, %c0_i32 : i32, i32
  }
  func.func @transform_1(%arg0: i32) -> (i32, i32) {
    %c0_i32 = arith.constant 0 : i32
    %c0_i32_0 = arith.constant 0 : i32
    %c0_i32_1 = arith.constant 0 : i32
    return %c0_i32, %c0_i32_0 : i32, i32
  }
  func.func @transform_2(%arg0: i32) -> (i32, i32) {
    %c0_i32 = arith.constant 0 : i32
    %c0_i32_0 = arith.constant 0 : i32
    %c0_i32_1 = arith.constant 0 : i32
    return %c0_i32, %c0_i32_0 : i32, i32
  }
  func.func @transform_3(%arg0: i32) -> (i32, i32) {
    %c0_i32 = arith.constant 0 : i32
    %c0_i32_0 = arith.constant 0 : i32
    %c0_i32_1 = arith.constant 0 : i32
    return %c0_i32, %c0_i32_0 : i32, i32
  }
  func.func @transform_4(%arg0: i32) -> (i32, i32) {
    %c0_i32 = arith.constant 0 : i32
    %c0_i32_0 = arith.constant 0 : i32
    return %arg0, %c0_i32 : i32, i32
  }
  func.func @transform_5(%arg0: i32) -> (i32, i32) {
    %c0_i32 = arith.constant 0 : i32
    %c0_i32_0 = arith.constant 0 : i32
    return %arg0, %c0_i32 : i32, i32
  }
  func.func @transform_6(%arg0: i32) -> (i32, i32) {
    %c0_i32 = arith.constant 0 : i32
    %c0_i32_0 = arith.constant 0 : i32
    return %arg0, %c0_i32 : i32, i32
  }
}

</mosaic_0001>

<llo_original>
// kernel: tpu_custom_call.1
$region0: #{tpu_custom_call.1}
  #allocation0 [shape = 'u32[]', space=smem, size = 0x4, offset = 0x4, fixed_abs, tag = 'smem constant byte address 0x4 - core index']
  #allocation1 [shape = 'u32[144,128]{1,0:T(1,128)}', space=vmem, size = 0x12000, scoped, tag = 'internal scratch']
  %s0 = inlined_call_operand.hbm [shape: f32[64,128], index: 0, kind: input, shape index: {}]
  %s1 = inlined_call_operand.hbm [shape: f32[128,128], index: 1, kind: input, shape index: {}]
  %s2 = inlined_call_operand.hbm [shape: f32[128,128], index: 2, kind: input, shape index: {}]
  %s3 = inlined_call_operand.hbm [shape: f32[128,128], index: 3, kind: input, shape index: {}]
  %s4 = inlined_call_operand.hbm [shape: bf16[64,128], index: 4, kind: output, shape index: {0}]
  %s5 = inlined_call_operand.hbm [shape: bf16[64,128], index: 5, kind: output, shape index: {1}]
  %s6 = inlined_call_operand.hbm [shape: bf16[64,128], index: 6, kind: output, shape index: {2}]
  %7 = xla_tuple %s4, %s5, %s6
  %s8 = sld [smem:[#allocation0]]
  $region58: #{tpu_custom_call.1} parent=0
    _
  %s10 = ssub.s32 1, %s8
  %s11 = scalar_select 0, %s10, %s8
  $region1: #{tpu_custom_call.1} parent=0
    #allocation2 [shape = 'u8[32768]{0}', space=vmem, size = 0x8000, scoped, tag = 'input window, operand 0, single buffered']
    #allocation3 [shape = 's32[1]{0}', space=sflag, size = 0x4, scoped, tag = 'scoped memory for tpu_custom_call.1']
    #allocation4 [shape = 's32[1]{0}', space=sflag, size = 0x4, scoped, tag = 'scoped memory for tpu_custom_call.1']
    #allocation5 [shape = 'u8[65536]{0}', space=vmem, size = 0x10000, scoped, tag = 'input window, operand 1, single buffered']
    #allocation6 [shape = 's32[1]{0}', space=sflag, size = 0x4, scoped, tag = 'scoped memory for tpu_custom_call.1']
    #allocation7 [shape = 'u8[65536]{0}', space=vmem, size = 0x10000, scoped, tag = 'input window, operand 2, single buffered']
    #allocation8 [shape = 'u8[65536]{0}', space=vmem, size = 0x10000, scoped, tag = 'input window, operand 3, single buffered']
    #allocation9 [shape = 's32[1]{0}', space=sflag, size = 0x4, scoped, tag = 'scoped memory for tpu_custom_call.1']
    #allocation10 [shape = 'u8[16384]{0}', space=vmem, size = 0x4000, scoped, tag = 'output window, operand 0, single buffered']
    #allocation11 [shape = 'u8[16384]{0}', space=vmem, size = 0x4000, scoped, tag = 'output window, operand 1, single buffered']
    #allocation12 [shape = 's32[1]{0}', space=sflag, size = 0x4, scoped, tag = 'scoped memory for tpu_custom_call.1']
    #allocation13 [shape = 'u8[16384]{0}', space=vmem, size = 0x4000, scoped, tag = 'output window, operand 2, single buffered']
    %12 = vsyncpa [#allocation3], 0
    %13 = vsyncpa [#allocation6], 0
    %14 = vsyncpa [#allocation9], 0
    %15 = vsyncpa [#allocation4], 0
    %16 = vsyncpa [#allocation12], 0
    // Predicated region
    $region2: #{tpu_custom_call.1} parent=1 // pred_check
      _
    $region3: #{tpu_custom_call.1} parent=1 // pred_check_branch
      %18 = sbr.rel (0) target = $region5
    $region4: #{tpu_custom_call.1} parent=1 // pred_region
      %s20 = ssub.s32 1024, 1024
      %21 = vsyncadd [#allocation3], %s20
      %s22 = sshll.u32 [#allocation2], 4
      %s23 = int_to_ptr.vmem [resolvable:$true] %s22
      %28 = dma.hbm_to_vmem [thread:$0]  %s0, 1024, %s23, [#allocation3], 128, 128, 8
    $region5: #{tpu_custom_call.1} parent=1 // pred_fallthru
      _
    // Predicated region
    $region6: #{tpu_custom_call.1} parent=1 // pred_check
      _
    $region7: #{tpu_custom_call.1} parent=1 // pred_check_branch
      %30 = sbr.rel (0) target = $region9
    $region8: #{tpu_custom_call.1} parent=1 // pred_region
      %s32 = ssub.s32 2048, 2048
      %33 = vsyncadd [#allocation6], %s32
      %s34 = sshll.u32 [#allocation5], 4
      %s35 = int_to_ptr.vmem [resolvable:$true] %s34
      %40 = dma.hbm_to_vmem [thread:$0]  %s1, 2048, %s35, [#allocation6], 128, 128, 8
    $region9: #{tpu_custom_call.1} parent=1 // pred_fallthru
      _
    // Predicated region
    $region10: #{tpu_custom_call.1} parent=1 // pred_check
      _
    $region11: #{tpu_custom_call.1} parent=1 // pred_check_branch
      %42 = sbr.rel (0) target = $region13
    $region12: #{tpu_custom_call.1} parent=1 // pred_region
      %s44 = ssub.s32 2048, 2048
      %45 = vsyncadd [#allocation6], %s44
      %s46 = sshll.u32 [#allocation7], 4
      %s47 = int_to_ptr.vmem [resolvable:$true] %s46
      %52 = dma.hbm_to_vmem [thread:$0]  %s2, 2048, %s47, [#allocation6], 128, 128, 8
    $region13: #{tpu_custom_call.1} parent=1 // pred_fallthru
      _
    // Predicated region
    $region14: #{tpu_custom_call.1} parent=1 // pred_check
      _
    $region15: #{tpu_custom_call.1} parent=1 // pred_check_branch
      %54 = sbr.rel (0) target = $region17
    $region16: #{tpu_custom_call.1} parent=1 // pred_region
      %s56 = ssub.s32 2048, 2048
      %57 = vsyncadd [#allocation9], %s56
      %s58 = sshll.u32 [#allocation8], 4
      %s59 = int_to_ptr.vmem [resolvable:$true] %s58
      %64 = dma.hbm_to_vmem [thread:$0]  %s3, 2048, %s59, [#allocation9], 128, 128, 8
    $region17: #{tpu_custom_call.1} parent=1 // pred_fallthru
      _
    // Predicated region
    $region18: #{tpu_custom_call.1} parent=1 // pred_check
      _
    $region19: #{tpu_custom_call.1} parent=1 // pred_check_branch
      %66 = sbr.rel (0) target = $region21
    $region20: #{tpu_custom_call.1} parent=1 // pred_region
      %67 = dma.done [#allocation3], 1024
    $region21: #{tpu_custom_call.1} parent=1 // pred_fallthru
      _
    // Predicated region
    $region22: #{tpu_custom_call.1} parent=1 // pred_check
      _
    $region23: #{tpu_custom_call.1} parent=1 // pred_check_branch
      %69 = sbr.rel (0) target = $region25
    $region24: #{tpu_custom_call.1} parent=1 // pred_region
      %70 = dma.done [#allocation6], 2048
    $region25: #{tpu_custom_call.1} parent=1 // pred_fallthru
      _
    // Predicated region
    $region26: #{tpu_custom_call.1} parent=1 // pred_check
      _
    $region27: #{tpu_custom_call.1} parent=1 // pred_check_branch
      %72 = sbr.rel (0) target = $region29
    $region28: #{tpu_custom_call.1} parent=1 // pred_region
      %73 = dma.done [#allocation6], 2048
    $region29: #{tpu_custom_call.1} parent=1 // pred_fallthru
      _
    // Predicated region
    $region30: #{tpu_custom_call.1} parent=1 // pred_check
      _
    $region31: #{tpu_custom_call.1} parent=1 // pred_check_branch
      %75 = sbr.rel (0) target = $region33
    $region32: #{tpu_custom_call.1} parent=1 // pred_region
      %76 = dma.done [#allocation9], 2048
    $region33: #{tpu_custom_call.1} parent=1 // pred_fallthru
      _
    %v78 = vld [vmem:[#allocation2] sm:$0xff]
    %v79 = vld [vmem:[#allocation2 + $0x8] sm:$0xff]
    %v80 = vld [vmem:[#allocation2 + $0x10] sm:$0xff]
    %v81 = vld [vmem:[#allocation2 + $0x18] sm:$0xff]
    %v82 = vld [vmem:[#allocation2 + $0x20] sm:$0xff]
    %v83 = vld [vmem:[#allocation2 + $0x28] sm:$0xff]
    %v84 = vld [vmem:[#allocation2 + $0x30] sm:$0xff]
    %v85 = vld [vmem:[#allocation2 + $0x38] sm:$0xff]
    %v86 = vld [vmem:[#allocation5] sm:$0xff]
    %v87 = vld [vmem:[#allocation5 + $0x8] sm:$0xff]
    %v88 = vld [vmem:[#allocation5 + $0x10] sm:$0xff]
    %v89 = vld [vmem:[#allocation5 + $0x18] sm:$0xff]
    %v90 = vld [vmem:[#allocation5 + $0x20] sm:$0xff]
    %v91 = vld [vmem:[#allocation5 + $0x28] sm:$0xff]
    %v92 = vld [vmem:[#allocation5 + $0x30] sm:$0xff]
    %v93 = vld [vmem:[#allocation5 + $0x38] sm:$0xff]
    %v94 = vld [vmem:[#allocation5 + $0x40] sm:$0xff]
    %v95 = vld [vmem:[#allocation5 + $0x48] sm:$0xff]
    %v96 = vld [vmem:[#allocation5 + $0x50] sm:$0xff]
    %v97 = vld [vmem:[#allocation5 + $0x58] sm:$0xff]
    %v98 = vld [vmem:[#allocation5 + $0x60] sm:$0xff]
    %v99 = vld [vmem:[#allocation5 + $0x68] sm:$0xff]
    %v100 = vld [vmem:[#allocation5 + $0x70] sm:$0xff]
    %v101 = vld [vmem:[#allocation5 + $0x78] sm:$0xff]
    %v102 = vpack.c.bf16 %v79, %v78
    %v103 = vpack.c.bf16 %v81, %v80
    %v104 = vpack.c.bf16 %v83, %v82
    %v105 = vpack.c.bf16 %v85, %v84
    %v106 = vpack.c.bf16 %v87, %v86
    %v107 = vpack.c.bf16 %v89, %v88
    %v108 = vpack.c.bf16 %v91, %v90
    %v109 = vpack.c.bf16 %v93, %v92
    %v110 = vpack.c.bf16 %v95, %v94
    %v111 = vpack.c.bf16 %v97, %v96
    %v112 = vpack.c.bf16 %v99, %v98
    %v113 = vpack.c.bf16 %v101, %v100
    %114 = vmatprep.subr.bf16.mxu0 0
    %115 = vmatpush1.bf16.msra.mxu0 %v113
    %116 = vmatprep.subr.bf16.mxu0 0
    %117 = vmatpush1.bf16.msra.mxu0 %v112
    %118 = vmatprep.subr.bf16.mxu0 0
    %119 = vmatpush1.bf16.msra.mxu0 %v111
    %120 = vmatprep.subr.bf16.mxu0 0
    %121 = vmatpush1.bf16.msra.mxu0 %v110
    %122 = vmatprep.subr.bf16.mxu0 0
    %123 = vmatpush1.bf16.msra.mxu0 %v109
    %124 = vmatprep.subr.bf16.mxu0 0
    %125 = vmatpush1.bf16.msra.mxu0 %v108
    %126 = vmatprep.subr.bf16.mxu0 0
    %127 = vmatpush1.bf16.msra.mxu0 %v107
    %128 = vmatprep.subr.bf16.mxu0 0
    %129 = vmatpush1.bf16.msra.mxu0 %v106
    %130 = vmatprep.subr.bf16.mxu0 0
    %131 = vmatpush2.bf16.msra.mxu0 0
    %132 = vmatprep.subr.bf16.mxu0 0
    %133 = vmatpush2.bf16.msra.mxu0 0
    %134 = vmatprep.subr.bf16.mxu0 0
    %135 = vmatpush2.bf16.msra.mxu0 0
    %136 = vmatprep.subr.bf16.mxu0 0
    %137 = vmatpush2.bf16.msra.mxu0 0
    %138 = vmatprep.subr.bf16.mxu0 0
    %139 = vmatpush2.bf16.msra.mxu0 0
    %140 = vmatprep.subr.bf16.mxu0 0
    %141 = vmatpush2.bf16.msra.mxu0 0
    %142 = vmatprep.subr.bf16.mxu0 0
    %143 = vmatpush2.bf16.msra.mxu0 0
    %144 = vmatprep.subr.bf16.mxu0 0
    %145 = vmatpush2.bf16.msra.mxu0 0
    %146 = vmatprep.mubr.bf16.mxu0 0
    %147 = vmatmul.mubr.bf16.gmra.mxu0 %v102
    %v148 = vpop.f32.mrf.mxu0
    %v149 = vadd.f32 0.0, %v148
    %v150 = vpop.f32.mrf.mxu0
    %v151 = vpop.f32.mrf.mxu0
    %v152 = vadd.f32 0.0, %v151
    %v153 = vpop.f32.mrf.mxu0
    %154 = vmatprep.mubr.bf16.mxu0 0
    %155 = vmatmul.mubr.bf16.gmra.mxu0 %v103
    %v156 = vpop.f32.mrf.mxu0
    %v157 = vadd.f32 0.0, %v156
    %v158 = vpop.f32.mrf.mxu0
    %v159 = vpop.f32.mrf.mxu0
    %v160 = vadd.f32 0.0, %v159
    %v161 = vpop.f32.mrf.mxu0
    %162 = vmatprep.mubr.bf16.mxu0 0
    %163 = vmatmul.mubr.bf16.gmra.mxu0 %v104
    %v164 = vpop.f32.mrf.mxu0
    %v165 = vadd.f32 0.0, %v164
    %v166 = vpop.f32.mrf.mxu0
    %v167 = vpop.f32.mrf.mxu0
    %v168 = vadd.f32 0.0, %v167
    %v169 = vpop.f32.mrf.mxu0
    %170 = vmatprep.mubr.bf16.mxu0 0
    %171 = vmatmul.mubr.bf16.gmra.mxu0 %v105
    %v172 = vpop.f32.mrf.mxu0
    %v173 = vadd.f32 0.0, %v172
    %v174 = vpop.f32.mrf.mxu0
    %v175 = vpop.f32.mrf.mxu0
    %v176 = vadd.f32 0.0, %v175
    %v177 = vpop.f32.mrf.mxu0
    %178 = vdwg.mxu0
    %v179 = vmul.f32 %v149, 0.17677669
    %v180 = vmul.f32 %v152, 0.17677669
    %v181 = vmul.f32 %v157, 0.17677669
    %v182 = vmul.f32 %v160, 0.17677669
    %v183 = vmul.f32 %v165, 0.17677669
    %v184 = vmul.f32 %v168, 0.17677669
    %v185 = vmul.f32 %v173, 0.17677669
    %v186 = vmul.f32 %v176, 0.17677669
    %v187 = vpack.c.bf16 %v180, %v179
    %v188 = vpack.c.bf16 %v182, %v181
    %v189 = vpack.c.bf16 %v184, %v183
    %v190 = vpack.c.bf16 %v186, %v185
    %v195 = vunpack.c.l.b16 %v187
    %v196 = vunpack.c.h.b16 %v187
    %v197 = vunpack.c.l.b16 %v188
    %v198 = vunpack.c.h.b16 %v188
    %v199 = vunpack.c.l.b16 %v189
    %v200 = vunpack.c.h.b16 %v189
    %v201 = vunpack.c.l.b16 %v190
    %v202 = vunpack.c.h.b16 %v190
    %v203 = vpack.c.b16 %v195, %v195
    %v204 = vpack.c.b16 %v196, %v196
    %v205 = vpack.c.b16 %v197, %v197
    %v206 = vpack.c.b16 %v198, %v198
    %v207 = vpack.c.b16 %v199, %v199
    %v208 = vpack.c.b16 %v200, %v200
    %v209 = vpack.c.b16 %v201, %v201
    %v210 = vpack.c.b16 %v202, %v202
    %219 = vst [vmem:[#allocation10] sm:$0xf] %v203
    %220 = vst [vmem:[#allocation10 + $0x4] sm:$0xf] %v204
    %221 = vst [vmem:[#allocation10 + $0x8] sm:$0xf] %v205
    %222 = vst [vmem:[#allocation10 + $0xc] sm:$0xf] %v206
    %223 = vst [vmem:[#allocation10 + $0x10] sm:$0xf] %v207
    %224 = vst [vmem:[#allocation10 + $0x14] sm:$0xf] %v208
    %225 = vst [vmem:[#allocation10 + $0x18] sm:$0xf] %v209
    %226 = vst [vmem:[#allocation10 + $0x1c] sm:$0xf] %v210
    %v227 = vld [vmem:[#allocation7] sm:$0xff]
    %v228 = vld [vmem:[#allocation7 + $0x8] sm:$0xff]
    %v229 = vld [vmem:[#allocation7 + $0x10] sm:$0xff]
    %v230 = vld [vmem:[#allocation7 + $0x18] sm:$0xff]
    %v231 = vld [vmem:[#allocation7 + $0x20] sm:$0xff]
    %v232 = vld [vmem:[#allocation7 + $0x28] sm:$0xff]
    %v233 = vld [vmem:[#allocation7 + $0x30] sm:$0xff]
    %v234 = vld [vmem:[#allocation7 + $0x38] sm:$0xff]
    %v235 = vld [vmem:[#allocation7 + $0x40] sm:$0xff]
    %v236 = vld [vmem:[#allocation7 + $0x48] sm:$0xff]
    %v237 = vld [vmem:[#allocation7 + $0x50] sm:$0xff]
    %v238 = vld [vmem:[#allocation7 + $0x58] sm:$0xff]
    %v239 = vld [vmem:[#allocation7 + $0x60] sm:$0xff]
    %v240 = vld [vmem:[#allocation7 + $0x68] sm:$0xff]
    %v241 = vld [vmem:[#allocation7 + $0x70] sm:$0xff]
    %v242 = vld [vmem:[#allocation7 + $0x78] sm:$0xff]
    %v243 = vpack.c.bf16 %v228, %v227
    %v244 = vpack.c.bf16 %v230, %v229
    %v245 = vpack.c.bf16 %v232, %v231
    %v246 = vpack.c.bf16 %v234, %v233
    %v247 = vpack.c.bf16 %v236, %v235
    %v248 = vpack.c.bf16 %v238, %v237
    %v249 = vpack.c.bf16 %v240, %v239
    %v250 = vpack.c.bf16 %v242, %v241
    %251 = vmatprep.subr.bf16.mxu0 0
    %252 = vmatpush1.bf16.msra.mxu0 %v250
    %253 = vmatprep.subr.bf16.mxu0 0
    %254 = vmatpush1.bf16.msra.mxu0 %v249
    %255 = vmatprep.subr.bf16.mxu0 0
    %256 = vmatpush1.bf16.msra.mxu0 %v248
    %257 = vmatprep.subr.bf16.mxu0 0
    %258 = vmatpush1.bf16.msra.mxu0 %v247
    %259 = vmatprep.subr.bf16.mxu0 0
    %260 = vmatpush1.bf16.msra.mxu0 %v246
    %261 = vmatprep.subr.bf16.mxu0 0
    %262 = vmatpush1.bf16.msra.mxu0 %v245
    %263 = vmatprep.subr.bf16.mxu0 0
    %264 = vmatpush1.bf16.msra.mxu0 %v244
    %265 = vmatprep.subr.bf16.mxu0 0
    %266 = vmatpush1.bf16.msra.mxu0 %v243
    %267 = vmatprep.subr.bf16.mxu0 0
    %268 = vmatpush2.bf16.msra.mxu0 0
    %269 = vmatprep.subr.bf16.mxu0 0
    %270 = vmatpush2.bf16.msra.mxu0 0
    %271 = vmatprep.subr.bf16.mxu0 0
    %272 = vmatpush2.bf16.msra.mxu0 0
    %273 = vmatprep.subr.bf16.mxu0 0
    %274 = vmatpush2.bf16.msra.mxu0 0
    %275 = vmatprep.subr.bf16.mxu0 0
    %276 = vmatpush2.bf16.msra.mxu0 0
    %277 = vmatprep.subr.bf16.mxu0 0
    %278 = vmatpush2.bf16.msra.mxu0 0
    %279 = vmatprep.subr.bf16.mxu0 0
    %280 = vmatpush2.bf16.msra.mxu0 0
    %281 = vmatprep.subr.bf16.mxu0 0
    %282 = vmatpush2.bf16.msra.mxu0 0
    %283 = vmatprep.mubr.bf16.mxu0 0
    %284 = vmatmul.mubr.bf16.gmra.mxu0 %v102
    %v285 = vpop.f32.mrf.mxu0
    %v286 = vadd.f32 0.0, %v285
    %v287 = vpop.f32.mrf.mxu0
    %v288 = vpop.f32.mrf.mxu0
    %v289 = vadd.f32 0.0, %v288
    %v290 = vpop.f32.mrf.mxu0
    %291 = vmatprep.mubr.bf16.mxu0 0
    %292 = vmatmul.mubr.bf16.gmra.mxu0 %v103
    %v293 = vpop.f32.mrf.mxu0
    %v294 = vadd.f32 0.0, %v293
    %v295 = vpop.f32.mrf.mxu0
    %v296 = vpop.f32.mrf.mxu0
    %v297 = vadd.f32 0.0, %v296
    %v298 = vpop.f32.mrf.mxu0
    %299 = vmatprep.mubr.bf16.mxu0 0
    %300 = vmatmul.mubr.bf16.gmra.mxu0 %v104
    %v301 = vpop.f32.mrf.mxu0
    %v302 = vadd.f32 0.0, %v301
    %v303 = vpop.f32.mrf.mxu0
    %v304 = vpop.f32.mrf.mxu0
    %v305 = vadd.f32 0.0, %v304
    %v306 = vpop.f32.mrf.mxu0
    %307 = vmatprep.mubr.bf16.mxu0 0
    %308 = vmatmul.mubr.bf16.gmra.mxu0 %v105
    %v309 = vpop.f32.mrf.mxu0
    %v310 = vadd.f32 0.0, %v309
    %v311 = vpop.f32.mrf.mxu0
    %v312 = vpop.f32.mrf.mxu0
    %v313 = vadd.f32 0.0, %v312
    %v314 = vpop.f32.mrf.mxu0
    %315 = vdwg.mxu0
    %v316 = vpack.c.bf16 %v289, %v286
    %v317 = vpack.c.bf16 %v297, %v294
    %v318 = vpack.c.bf16 %v305, %v302
    %v319 = vpack.c.bf16 %v313, %v310
    %v324 = vunpack.c.l.b16 %v316
    %v325 = vunpack.c.h.b16 %v316
    %v326 = vunpack.c.l.b16 %v317
    %v327 = vunpack.c.h.b16 %v317
    %v328 = vunpack.c.l.b16 %v318
    %v329 = vunpack.c.h.b16 %v318
    %v330 = vunpack.c.l.b16 %v319
    %v331 = vunpack.c.h.b16 %v319
    %v332 = vpack.c.b16 %v324, %v324
    %v333 = vpack.c.b16 %v325, %v325
    %v334 = vpack.c.b16 %v326, %v326
    %v335 = vpack.c.b16 %v327, %v327
    %v336 = vpack.c.b16 %v328, %v328
    %v337 = vpack.c.b16 %v329, %v329
    %v338 = vpack.c.b16 %v330, %v330
    %v339 = vpack.c.b16 %v331, %v331
    %348 = vst [vmem:[#allocation11] sm:$0xf] %v332
    %349 = vst [vmem:[#allocation11 + $0x4] sm:$0xf] %v333
    %350 = vst [vmem:[#allocation11 + $0x8] sm:$0xf] %v334
    %351 = vst [vmem:[#allocation11 + $0xc] sm:$0xf] %v335
    %352 = vst [vmem:[#allocation11 + $0x10] sm:$0xf] %v336
    %353 = vst [vmem:[#allocation11 + $0x14] sm:$0xf] %v337
    %354 = vst [vmem:[#allocation11 + $0x18] sm:$0xf] %v338
    %355 = vst [vmem:[#allocation11 + $0x1c] sm:$0xf] %v339
    %v356 = vld [vmem:[#allocation8] sm:$0xff]
    %v357 = vld [vmem:[#allocation8 + $0x8] sm:$0xff]
    %v358 = vld [vmem:[#allocation8 + $0x10] sm:$0xff]
    %v359 = vld [vmem:[#allocation8 + $0x18] sm:$0xff]
    %v360 = vld [vmem:[#allocation8 + $0x20] sm:$0xff]
    %v361 = vld [vmem:[#allocation8 + $0x28] sm:$0xff]
    %v362 = vld [vmem:[#allocation8 + $0x30] sm:$0xff]
    %v363 = vld [vmem:[#allocation8 + $0x38] sm:$0xff]
    %v364 = vld [vmem:[#allocation8 + $0x40] sm:$0xff]
    %v365 = vld [vmem:[#allocation8 + $0x48] sm:$0xff]
    %v366 = vld [vmem:[#allocation8 + $0x50] sm:$0xff]
    %v367 = vld [vmem:[#allocation8 + $0x58] sm:$0xff]
    %v368 = vld [vmem:[#allocation8 + $0x60] sm:$0xff]
    %v369 = vld [vmem:[#allocation8 + $0x68] sm:$0xff]
    %v370 = vld [vmem:[#allocation8 + $0x70] sm:$0xff]
    %v371 = vld [vmem:[#allocation8 + $0x78] sm:$0xff]
    %v372 = vpack.c.bf16 %v357, %v356
    %v373 = vpack.c.bf16 %v359, %v358
    %v374 = vpack.c.bf16 %v361, %v360
    %v375 = vpack.c.bf16 %v363, %v362
    %v376 = vpack.c.bf16 %v365, %v364
    %v377 = vpack.c.bf16 %v367, %v366
    %v378 = vpack.c.bf16 %v369, %v368
    %v379 = vpack.c.bf16 %v371, %v370
    %380 = vmatprep.subr.bf16.mxu0 0
    %381 = vmatpush1.bf16.msra.mxu0 %v379
    %382 = vmatprep.subr.bf16.mxu0 0
    %383 = vmatpush1.bf16.msra.mxu0 %v378
    %384 = vmatprep.subr.bf16.mxu0 0
    %385 = vmatpush1.bf16.msra.mxu0 %v377
    %386 = vmatprep.subr.bf16.mxu0 0
    %387 = vmatpush1.bf16.msra.mxu0 %v376
    %388 = vmatprep.subr.bf16.mxu0 0
    %389 = vmatpush1.bf16.msra.mxu0 %v375
    %390 = vmatprep.subr.bf16.mxu0 0
    %391 = vmatpush1.bf16.msra.mxu0 %v374
    %392 = vmatprep.subr.bf16.mxu0 0
    %393 = vmatpush1.bf16.msra.mxu0 %v373
    %394 = vmatprep.subr.bf16.mxu0 0
    %395 = vmatpush1.bf16.msra.mxu0 %v372
    %396 = vmatprep.subr.bf16.mxu0 0
    %397 = vmatpush2.bf16.msra.mxu0 0
    %398 = vmatprep.subr.bf16.mxu0 0
    %399 = vmatpush2.bf16.msra.mxu0 0
    %400 = vmatprep.subr.bf16.mxu0 0
    %401 = vmatpush2.bf16.msra.mxu0 0
    %402 = vmatprep.subr.bf16.mxu0 0
    %403 = vmatpush2.bf16.msra.mxu0 0
    %404 = vmatprep.subr.bf16.mxu0 0
    %405 = vmatpush2.bf16.msra.mxu0 0
    %406 = vmatprep.subr.bf16.mxu0 0
    %407 = vmatpush2.bf16.msra.mxu0 0
    %408 = vmatprep.subr.bf16.mxu0 0
    %409 = vmatpush2.bf16.msra.mxu0 0
    %410 = vmatprep.subr.bf16.mxu0 0
    %411 = vmatpush2.bf16.msra.mxu0 0
    %412 = vmatprep.mubr.bf16.mxu0 0
    %413 = vmatmul.mubr.bf16.gmra.mxu0 %v102
    %v414 = vpop.f32.mrf.mxu0
    %v415 = vadd.f32 0.0, %v414
    %v416 = vpop.f32.mrf.mxu0
    %v417 = vpop.f32.mrf.mxu0
    %v418 = vadd.f32 0.0, %v417
    %v419 = vpop.f32.mrf.mxu0
    %420 = vmatprep.mubr.bf16.mxu0 0
    %421 = vmatmul.mubr.bf16.gmra.mxu0 %v103
    %v422 = vpop.f32.mrf.mxu0
    %v423 = vadd.f32 0.0, %v422
    %v424 = vpop.f32.mrf.mxu0
    %v425 = vpop.f32.mrf.mxu0
    %v426 = vadd.f32 0.0, %v425
    %v427 = vpop.f32.mrf.mxu0
    %428 = vmatprep.mubr.bf16.mxu0 0
    %429 = vmatmul.mubr.bf16.gmra.mxu0 %v104
    %v430 = vpop.f32.mrf.mxu0
    %v431 = vadd.f32 0.0, %v430
    %v432 = vpop.f32.mrf.mxu0
    %v433 = vpop.f32.mrf.mxu0
    %v434 = vadd.f32 0.0, %v433
    %v435 = vpop.f32.mrf.mxu0
    %436 = vmatprep.mubr.bf16.mxu0 0
    %437 = vmatmul.mubr.bf16.gmra.mxu0 %v105
    %v438 = vpop.f32.mrf.mxu0
    %v439 = vadd.f32 0.0, %v438
    %v440 = vpop.f32.mrf.mxu0
    %v441 = vpop.f32.mrf.mxu0
    %v442 = vadd.f32 0.0, %v441
    %v443 = vpop.f32.mrf.mxu0
    %444 = vdwg.mxu0
    %v445 = vpack.c.bf16 %v418, %v415
    %v446 = vpack.c.bf16 %v426, %v423
    %v447 = vpack.c.bf16 %v434, %v431
    %v448 = vpack.c.bf16 %v442, %v439
    %v453 = vunpack.c.l.b16 %v445
    %v454 = vunpack.c.h.b16 %v445
    %v455 = vunpack.c.l.b16 %v446
    %v456 = vunpack.c.h.b16 %v446
    %v457 = vunpack.c.l.b16 %v447
    %v458 = vunpack.c.h.b16 %v447
    %v459 = vunpack.c.l.b16 %v448
    %v460 = vunpack.c.h.b16 %v448
    %v461 = vpack.c.b16 %v453, %v453
    %v462 = vpack.c.b16 %v454, %v454
    %v463 = vpack.c.b16 %v455, %v455
    %v464 = vpack.c.b16 %v456, %v456
    %v465 = vpack.c.b16 %v457, %v457
    %v466 = vpack.c.b16 %v458, %v458
    %v467 = vpack.c.b16 %v459, %v459
    %v468 = vpack.c.b16 %v460, %v460
    %477 = vst [vmem:[#allocation13] sm:$0xf] %v461
    %478 = vst [vmem:[#allocation13 + $0x4] sm:$0xf] %v462
    %479 = vst [vmem:[#allocation13 + $0x8] sm:$0xf] %v463
    %480 = vst [vmem:[#allocation13 + $0xc] sm:$0xf] %v464
    %481 = vst [vmem:[#allocation13 + $0x10] sm:$0xf] %v465
    %482 = vst [vmem:[#allocation13 + $0x14] sm:$0xf] %v466
    %483 = vst [vmem:[#allocation13 + $0x18] sm:$0xf] %v467
    %484 = vst [vmem:[#allocation13 + $0x1c] sm:$0xf] %v468
    // Predicated region
    $region34: #{tpu_custom_call.1} parent=1 // pred_check
      _
    $region35: #{tpu_custom_call.1} parent=1 // pred_check_branch
      %486 = sbr.rel (0) target = $region37
    $region36: #{tpu_custom_call.1} parent=1 // pred_region
      %s488 = ssub.s32 512, 512
      %489 = vsyncadd [#allocation4], %s488
      %s490 = sshll.u32 [#allocation10], 4
      %s491 = int_to_ptr.vmem [resolvable:$true] %s490
      %496 = dma.vmem_to_hbm [thread:$0]  %s491, 512, %s4, [#allocation4], 64, 64, 4
    $region37: #{tpu_custom_call.1} parent=1 // pred_fallthru
      _
    // Predicated region
    $region38: #{tpu_custom_call.1} parent=1 // pred_check
      _
    $region39: #{tpu_custom_call.1} parent=1 // pred_check_branch
      %498 = sbr.rel (0) target = $region41
    $region40: #{tpu_custom_call.1} parent=1 // pred_region
      %s500 = ssub.s32 512, 512
      %501 = vsyncadd [#allocation12], %s500
      %s502 = sshll.u32 [#allocation11], 4
      %s503 = int_to_ptr.vmem [resolvable:$true] %s502
      %508 = dma.vmem_to_hbm [thread:$0]  %s503, 512, %s5, [#allocation12], 64, 64, 4
    $region41: #{tpu_custom_call.1} parent=1 // pred_fallthru
      _
    // Predicated region
    $region42: #{tpu_custom_call.1} parent=1 // pred_check
      _
    $region43: #{tpu_custom_call.1} parent=1 // pred_check_branch
      %510 = sbr.rel (0) target = $region45
    $region44: #{tpu_custom_call.1} parent=1 // pred_region
      %s512 = ssub.s32 512, 512
      %513 = vsyncadd [#allocation12], %s512
      %s514 = sshll.u32 [#allocation13], 4
      %s515 = int_to_ptr.vmem [resolvable:$true] %s514
      %520 = dma.vmem_to_hbm [thread:$0]  %s515, 512, %s6, [#allocation12], 64, 64, 4
    $region45: #{tpu_custom_call.1} parent=1 // pred_fallthru
      _
    // Predicated region
    $region46: #{tpu_custom_call.1} parent=1 // pred_check
      _
    $region47: #{tpu_custom_call.1} parent=1 // pred_check_branch
      %522 = sbr.rel (0) target = $region49
    $region48: #{tpu_custom_call.1} parent=1 // pred_region
      %523 = dma.done [#allocation4], 512
    $region49: #{tpu_custom_call.1} parent=1 // pred_fallthru
      _
    // Predicated region
    $region50: #{tpu_custom_call.1} parent=1 // pred_check
      _
    $region51: #{tpu_custom_call.1} parent=1 // pred_check_branch
      %525 = sbr.rel (0) target = $region53
    $region52: #{tpu_custom_call.1} parent=1 // pred_region
      %526 = dma.done [#allocation12], 512
    $region53: #{tpu_custom_call.1} parent=1 // pred_fallthru
      _
    // Predicated region
    $region54: #{tpu_custom_call.1} parent=1 // pred_check
      _
    $region55: #{tpu_custom_call.1} parent=1 // pred_check_branch
      %528 = sbr.rel (0) target = $region57
    $region56: #{tpu_custom_call.1} parent=1 // pred_region
      %529 = dma.done [#allocation12], 512
    $region57: #{tpu_custom_call.1} parent=1 // pred_fallthru
      _
    %530 = vsyncpa [#allocation3], 1
    %531 = vsyncpa [#allocation6], 1
    %532 = vsyncpa [#allocation9], 1
    %533 = vsyncpa [#allocation4], 1
    %534 = vsyncpa [#allocation12], 1

</llo_original>
